<compile_context>
chip_gen: v5e
topology: v5e:2x2
jax: 0.10.0
libtpu: 0.0.40
codegen_flags: <defaults>
</compile_context>

<pallas_src>
import math

import jax
import jax.numpy as jnp
from jax.experimental import pallas as pl
from jax.experimental.pallas import tpu as pltpu

# Contract lhs dim 1 with rhs dim 1 ("NT" pattern, same as the TPU flash-attn ops).
_NT_DIM_NUMBERS = (((1,), (1,)), ((), ()))

_LANE = 128
_F32_BYTES = 4


def _round_up(n, m):
    return ((n + m - 1) // m) * m


def _round_down(n, m):
    return (n // m) * m


def _make_logreg_kernel(d, chunk, nchunks):
    """Kernel over one (tb, d) batch tile; tb == chunk * nchunks."""

    def compute_chunk(x_chunk, w8, bias):
        # (8, d) x (chunk, d)^T -> (8, chunk), lane-dense along the batch chunk.
        z8 = jax.lax.dot_general(
            w8, x_chunk, _NT_DIM_NUMBERS, preferred_element_type=jnp.float32)
        z = z8[0:1, :] + bias                       # (1, chunk); only row 0 is real
        # sigmoid(z) = 0.5 * (tanh(z / 2) + 1): one EUP op, exact numerics.
        return 0.5 * (jnp.tanh(0.5 * z) + 1.0)

    def kernel(x_ref, w_ref, b_ref, o_ref):
        # x_ref: (tb, d) VMEM   -- one batch tile of inputs (streamed from HBM)
        # w_ref: (1, d)  VMEM   -- the single output-neuron weight row (resident)
        # b_ref: (1, 1)  SMEM   -- bias scalar
        # o_ref: (1, tb) VMEM   -- lane-dense output row slab
        w8 = jnp.broadcast_to(w_ref[...], (8, d))   # in-kernel sublane broadcast (1 vreg)
        bias = b_ref[0, 0]

        if nchunks <= 8:
            # Short trip count: static unroll with static slices.
            for c in range(nchunks):
                lo = c * chunk
                o_ref[:, lo:lo + chunk] = compute_chunk(
                    x_ref[lo:lo + chunk, :], w8, bias).astype(o_ref.dtype)
        else:
            # Long trip count: rolled loop; chunk-aligned dynamic slices keep the
            # live set at ~(8, chunk) f32 (~4 vregs) regardless of DMA tile size.
            def body(c, carry):
                lo = pl.multiple_of(c * chunk, chunk)
                o_ref[:, pl.ds(lo, chunk)] = compute_chunk(
                    x_ref[pl.ds(lo, chunk), :], w8, bias).astype(o_ref.dtype)
                return carry

            jax.lax.fori_loop(0, nchunks, body, 0)

    return kernel


def logistic_regression_forward(x, weight, bias, *,
                                target_tile_bytes=4 << 20,
                                vmem_x_budget_bytes=32 << 20,
                                chunk_rows=512):
    """sigmoid(x @ weight.T + bias).

    x:      (B, D) float32
    weight: (1, D) float32   (nn.Linear weight layout)
    bias:   (1,) or () float32
    returns (B, 1) float32
    """
    assert chunk_rows % _LANE == 0
    B, D = x.shape
    x = x.astype(jnp.float32)
    w2d = jnp.reshape(weight.astype(jnp.float32), (1, D))
    b2d = jnp.reshape(bias.astype(jnp.float32), (1, 1))

    # Lane-padded VMEM bytes of one x row: (tb, D) f32 is stored in (8, 128)
    # tiles, so D=32 costs 128 lanes' worth of VMEM per row.
    padded_row_bytes = _round_up(D, _LANE) * _F32_BYTES

    if B <= _LANE:
        # Tiny batch: single full-array block, grid of 1, no edge handling needed.
        tb = B
    else:
        # Rows per tile from the real-byte target (amortize per-step overhead),
        # capped by the lane-padded, double-buffered VMEM budget, and capped so
        # the grid keeps >= ~8 steps on large B (v7x 2-TensorCore balance).
        tb_target = max(_LANE, target_tile_bytes // (D * _F32_BYTES))
        tb_vmem = max(_LANE, vmem_x_budget_bytes // (2 * padded_row_bytes))
        tb_grid = max(_LANE, _round_up(pl.cdiv(B, 8), _LANE))
        tb_max = _round_up(B, _LANE)
        tb = max(_LANE, min(tb_target, tb_vmem, tb_grid, tb_max))
        tb = _round_down(tb, _LANE)
        if tb >= chunk_rows:
            tb = _round_down(tb, chunk_rows)   # keep tb a multiple of the chunk

    chunk = min(chunk_rows, tb)
    assert tb % chunk == 0
    nchunks = tb // chunk
    g = pl.cdiv(B, tb)

    # Explicit scoped-VMEM limit only when the lane-padded footprint would not
    # comfortably fit the smallest default (v5e: 16 MiB).
    est_vmem = (2 * tb * padded_row_bytes                     # x double buffer
                + 2 * 8 * _round_up(tb, _LANE) * _F32_BYTES   # (1, tb) out, sublane-padded
                + (1 << 20))                                   # weight / bias / slack
    vmem_limit = min(est_vmem + (8 << 20), 48 << 20) if est_vmem > (14 << 20) else None

    out_row = pl.pallas_call(
        _make_logreg_kernel(D, chunk, nchunks),
        out_shape=jax.ShapeDtypeStruct((1, B), jnp.float32),
        grid_spec=pltpu.PrefetchScalarGridSpec(
            num_scalar_prefetch=0,
            grid=(g,),
            in_specs=[
                pl.BlockSpec((tb, D), lambda i: (i, 0)),               # x batch tile
                pl.BlockSpec((1, D), lambda i: (0, 0)),                # weight row (resident)
                pl.BlockSpec(memory_space=pltpu.MemorySpace.SMEM),     # bias scalar
            ],
            out_specs=pl.BlockSpec((1, tb), lambda i: (0, i)),         # lane-dense row slab
        ),
        compiler_params=pltpu.CompilerParams(
            dimension_semantics=("parallel",),
            vmem_limit_bytes=vmem_limit),
    )(x, w2d, b2d)

    return out_row.reshape(B, 1)


if __name__ == "__main__":
    # Small shapes consistent with the module: batch=8, input_dim=32.
    batch, input_dim = 8, 32
    key = jax.random.PRNGKey(0)
    kx, kw, kb = jax.random.split(key, 3)

    x = jax.random.normal(kx, (batch, input_dim), dtype=jnp.float32)

    # Deterministic parameter init mimicking nn.Linear(input_dim, 1):
    # uniform(-1/sqrt(input_dim), 1/sqrt(input_dim)) for weight and bias.
    bound = 1.0 / math.sqrt(input_dim)
    weight = jax.random.uniform(kw, (1, input_dim), dtype=jnp.float32,
                                minval=-bound, maxval=bound)
    bias = jax.random.uniform(kb, (1,), dtype=jnp.float32,
                              minval=-bound, maxval=bound)

    out = logistic_regression_forward(x, weight, bias)
    out = jax.block_until_ready(out)

    # Sanity check against a plain-JAX reference (tanh-based sigmoid is exact,
    # so only MXU-vs-XLA matmul rounding differences remain).
    ref = jax.nn.sigmoid(x @ weight.T + bias)
    assert out.shape == (batch, 1)
    assert jnp.allclose(out, ref, atol=1e-5, rtol=1e-5), "mismatch vs reference"

    print("KERNEL_OK")
</pallas_src>

<mosaic_0001>
module attributes {stable_mosaic.version = 11 : i64} {
  func.func @kernel(%arg0: i32, %arg1: memref<8x32xf32, #tpu.memory_space<vmem>>, %arg2: memref<1x32xf32, #tpu.memory_space<vmem>>, %arg3: memref<1x1xf32, #tpu.memory_space<smem>>, %arg4: memref<1x8xf32, #tpu.memory_space<vmem>>) attributes {dimension_semantics = [#tpu.dimension_semantics<parallel>], iteration_bounds = array<i64: 1>, scalar_prefetch = 0 : i64, scratch_operands = 0 : i64, tpu.core_type = #tpu.core_type<tc>, window_params = [{transform_indices = @transform_0, window_bounds = array<i64: 8, 32>}, {pipeline_mode = #tpu.pipeline_mode<synchronous>, transform_indices = @transform_1, window_bounds = array<i64: 1, 32>}, {transform_indices = @transform_2, window_bounds = array<i64: 1, 1>}, {transform_indices = @transform_3, window_bounds = array<i64: 1, 8>}]} {
    %c0 = arith.constant 0 : index
    %c0_0 = arith.constant 0 : index
    %0 = vector.load %arg2[%c0, %c0_0] : memref<1x32xf32, #tpu.memory_space<vmem>>, vector<1x32xf32>
    %1 = vector.shape_cast %0 : vector<1x32xf32> to vector<1x32xf32>
    %2 = vector.broadcast %1 : vector<1x32xf32> to vector<8x32xf32>
    %c0_1 = arith.constant 0 : index
    %c0_2 = arith.constant 0 : index
    %3 = memref.load %arg3[%c0_1, %c0_2] : memref<1x1xf32, #tpu.memory_space<smem>>
    %c0_3 = arith.constant 0 : index
    %c0_4 = arith.constant 0 : index
    %4 = vector.load %arg1[%c0_3, %c0_4] : memref<8x32xf32, #tpu.memory_space<vmem>>, vector<8x32xf32>
    %cst = arith.constant dense<0.000000e+00> : vector<8x8xf32>
    %5 = tpu.matmul %2, %4, %cst {dimension_numbers = #tpu.dot_dimension_numbers<[1], [1], [0], [0], [0, 0, 1, 0], [], []>} : vector<8x32xf32>, vector<8x32xf32>, vector<8x8xf32> -> vector<8x8xf32>
    %6 = vector.extract_strided_slice %5 {offsets = [0, 0], sizes = [1, 8], strides = [1, 1]} : vector<8x8xf32> to vector<1x8xf32>
    %7 = vector.broadcast %3 : f32 to vector<1x8xf32>
    %8 = arith.addf %6, %7 : vector<1x8xf32>
    %cst_5 = arith.constant 5.000000e-01 : f32
    %9 = vector.broadcast %cst_5 : f32 to vector<1x8xf32>
    %10 = arith.mulf %9, %8 : vector<1x8xf32>
    %11 = math.tanh %10 : vector<1x8xf32>
    %cst_6 = arith.constant 1.000000e+00 : f32
    %12 = vector.broadcast %cst_6 : f32 to vector<1x8xf32>
    %13 = arith.addf %11, %12 : vector<1x8xf32>
    %cst_7 = arith.constant 5.000000e-01 : f32
    %14 = vector.broadcast %cst_7 : f32 to vector<1x8xf32>
    %15 = arith.mulf %14, %13 : vector<1x8xf32>
    %c0_8 = arith.constant 0 : index
    %c0_9 = arith.constant 0 : index
    %16 = vector.load %arg4[%c0_8, %c0_9] : memref<1x8xf32, #tpu.memory_space<vmem>>, vector<1x8xf32>
    tpu.vector_store %arg4[%c0_8, %c0_9], %15 {strides = array<i32>} : memref<1x8xf32, #tpu.memory_space<vmem>>, vector<1x8xf32>,
    return
  }
  func.func @transform_0(%arg0: i32) -> (i32, i32) {
    %c0_i32 = arith.constant 0 : i32
    %c0_i32_0 = arith.constant 0 : i32
    return %arg0, %c0_i32 : i32, i32
  }
  func.func @transform_1(%arg0: i32) -> (i32, i32) {
    %c0_i32 = arith.constant 0 : i32
    %c0_i32_0 = arith.constant 0 : i32
    %c0_i32_1 = arith.constant 0 : i32
    return %c0_i32, %c0_i32_0 : i32, i32
  }
  func.func @transform_2(%arg0: i32) -> (i32, i32) {
    %c0_i32 = arith.constant 0 : i32
    %c0_i32_0 = arith.constant 0 : i32
    %c0_i32_1 = arith.constant 0 : i32
    return %c0_i32, %c0_i32_0 : i32, i32
  }
  func.func @transform_3(%arg0: i32) -> (i32, i32) {
    %c0_i32 = arith.constant 0 : i32
    %c0_i32_0 = arith.constant 0 : i32
    return %c0_i32, %arg0 : i32, i32
  }
}

</mosaic_0001>

<llo_original>
// kernel: tpu_custom_call.1
$region0: #{tpu_custom_call.1}
  #allocation0 [shape = 'u32[]', space=smem, size = 0x4, offset = 0x4, fixed_abs, tag = 'smem constant byte address 0x4 - core index']
  #allocation1 [shape = 'u32[72,128]{1,0:T(1,128)}', space=vmem, size = 0x9000, scoped, tag = 'internal scratch']
  #allocation2 [shape = 'f32[1,1]{1,0:T(1,128)S(6)}', space=smem, size = 0x200, scoped, tag = 'scoped memory for tpu_custom_call.1']
  %s0 = inlined_call_operand.hbm [shape: f32[8,32], index: 0, kind: input, shape index: {}]
  %s1 = inlined_call_operand.vmem [shape: f32[1,32], index: 1, kind: input, shape index: {}]
  %s2 = inlined_call_operand.<no memory space> [shape: f32[1,1], index: 2, kind: input, shape index: {}]
  %s3 = inlined_call_operand.hbm [shape: f32[1,8], index: 3, kind: output, shape index: {}]
  %s4 = sld [smem:[#allocation0]]
  $region26: #{tpu_custom_call.1} parent=0
    _
  %s6 = ssub.s32 1, %s4
  %s7 = scalar_select 0, %s6, %s4
  %8 = sst [smem:[#allocation2]] %s2
  $region1: #{tpu_custom_call.1} parent=0
    #allocation3 [shape = 'u8[4096]{0}', space=vmem, size = 0x1000, scoped, tag = 'input window, operand 0, single buffered']
    #allocation4 [shape = 's32[1]{0}', space=sflag, size = 0x4, scoped, tag = 'scoped memory for tpu_custom_call.1']
    #allocation5 [shape = 's32[1]{0}', space=sflag, size = 0x4, scoped, tag = 'scoped memory for tpu_custom_call.1']
    #allocation6 [shape = 'u8[512]{0}', space=vmem, size = 0x400, scoped, tag = 'output window, operand 0, single buffered']
    %9 = vsyncpa [#allocation4], 0
    %10 = vsyncpa [#allocation5], 0
    // Predicated region
    $region2: #{tpu_custom_call.1} parent=1 // pred_check
      _
    $region3: #{tpu_custom_call.1} parent=1 // pred_check_branch
      %12 = sbr.rel (0) target = $region5
    $region4: #{tpu_custom_call.1} parent=1 // pred_region
      %14 = vsyncadd [#allocation4], 0
      %s16 = sshll.u32 %s0, 4
      %s17 = int_to_ptr.hbm [resolvable:$true] %s16
      %s18 = sshll.u32 [#allocation3], 4
      %s19 = int_to_ptr.vmem [resolvable:$true] %s18
      %21 = dma.hbm_to_vmem [thread:$0]  %s17, 128, %s19, [#allocation4]
    $region5: #{tpu_custom_call.1} parent=1 // pred_fallthru
      _
    // Predicated region
    $region6: #{tpu_custom_call.1} parent=1 // pred_check
      _
    $region7: #{tpu_custom_call.1} parent=1 // pred_check_branch
      %23 = sbr.rel (0) target = $region9
    $region8: #{tpu_custom_call.1} parent=1 // pred_region
      _
    $region9: #{tpu_custom_call.1} parent=1 // pred_fallthru
      _
    // Predicated region
    $region10: #{tpu_custom_call.1} parent=1 // pred_check
      _
    $region11: #{tpu_custom_call.1} parent=1 // pred_check_branch
      %25 = sbr.rel (0) target = $region13
    $region12: #{tpu_custom_call.1} parent=1 // pred_region
      _
    $region13: #{tpu_custom_call.1} parent=1 // pred_fallthru
      _
    // Predicated region
    $region14: #{tpu_custom_call.1} parent=1 // pred_check
      _
    $region15: #{tpu_custom_call.1} parent=1 // pred_check_branch
      %27 = sbr.rel (0) target = $region17
    $region16: #{tpu_custom_call.1} parent=1 // pred_region
      %29 = dma.done [#allocation4], 128
    $region17: #{tpu_custom_call.1} parent=1 // pred_fallthru
      _
    %v30 = vld [vmem:[%s1] sm:$0x1]
    %v32 = vperm.slane %v30, 0
    %s33 = sld [smem:[#allocation2]]
    %v34 = vld [vmem:[#allocation3] sm:$0xff]
    %vm35 = vcmask 261120
    %v36 = vsel %vm35, %v32, 0
    %v39 = vsel %vm35, %v34, 0
    %41 = vmatpush.xpose.msra.mxu0 0.0
    %42 = vmatpush.xpose.msra.mxu0 0.0
    %43 = vmatpush.xpose.msra.mxu0 0.0
    %44 = vmatpush.xpose.msra.mxu0 0.0
    %45 = vmatpush.xpose.msra.mxu0 0.0
    %46 = vmatpush.xpose.msra.mxu0 0.0
    %47 = vmatpush.xpose.msra.mxu0 0.0
    %48 = vmatpush.xpose.msra.mxu0 0.0
    %49 = vmatpush.xpose.msra.mxu0 0.0
    %50 = vmatpush.xpose.msra.mxu0 0.0
    %51 = vmatpush.xpose.msra.mxu0 0.0
    %52 = vmatpush.xpose.msra.mxu0 0.0
    %53 = vmatpush.xpose.msra.mxu0 0.0
    %54 = vmatpush.xpose.msra.mxu0 0.0
    %55 = vmatpush.xpose.msra.mxu0 0.0
    %56 = vmatpush.xpose.msra.mxu0 %v39
    %57 = vmatmul.f32.gmra.mxu0 %v36
    %v58 = vpop.f32.mrf.mxu0
    %v59 = vadd.f32 0.0, %v58
    %60 = vdwg.mxu0
    %v61 = vstv %s33
    %v62 = vadd.f32 %v59, %v61
    %v63 = vmul.f32 %v62, 0.5
    %v64 = vtanh.pop %v63
    %v65 = vadd.f32 %v64, 1.0
    %v66 = vmul.f32 %v65, 0.5
    %vm67 = vcmask 57344
    %68 = vst.msk [vmem:[#allocation6] sm:$0x1] %vm67, %v66
    // Predicated region
    $region18: #{tpu_custom_call.1} parent=1 // pred_check
      _
    $region19: #{tpu_custom_call.1} parent=1 // pred_check_branch
      %70 = sbr.rel (0) target = $region21
    $region20: #{tpu_custom_call.1} parent=1 // pred_region
      %72 = vsyncadd [#allocation5], 0
      %s74 = sshll.u32 [#allocation6], 4
      %s75 = int_to_ptr.vmem [resolvable:$true] %s74
      %s76 = sshll.u32 %s3, 4
      %s77 = int_to_ptr.hbm [resolvable:$true] %s76
      %79 = dma.vmem_to_hbm [thread:$0]  %s75, 16, %s77, [#allocation5]
    $region21: #{tpu_custom_call.1} parent=1 // pred_fallthru
      _
    // Predicated region
    $region22: #{tpu_custom_call.1} parent=1 // pred_check
      _
    $region23: #{tpu_custom_call.1} parent=1 // pred_check_branch
      %81 = sbr.rel (0) target = $region25
    $region24: #{tpu_custom_call.1} parent=1 // pred_region
      %83 = dma.done [#allocation5], 16
    $region25: #{tpu_custom_call.1} parent=1 // pred_fallthru
      _
    %84 = vsyncpa [#allocation4], 1
    %85 = vsyncpa [#allocation5], 1

</llo_original>
